<compile_context>
chip_gen: v7x
topology: tpu7x:2x2x1
jax: 0.10.0
libtpu: 0.0.40
codegen_flags: <defaults>
</compile_context>

<pallas_src>
import functools

import jax
import jax.numpy as jnp
import numpy as np
from jax.experimental import pallas as pl
from jax.experimental.pallas import tpu as pltpu

_EPS = 1e-5   # PyTorch BatchNorm2d default
_LANE = 128


def _round_up(x, m):
    return -(-x // m) * m


# ----------------------------------------------------------------------------
# Kernel A: 1x1 conv (matmul) + folded BN + ReLU, tiled & pipelined over M.
# ----------------------------------------------------------------------------
def _conv1x1_bn_relu_kernel(x_ref, w_ref, s_ref, b_ref, o_ref):
    y = jnp.dot(x_ref[...], w_ref[...], preferred_element_type=jnp.float32)
    y = y * s_ref[...] + b_ref[...]            # f32 epilogue on the VPU
    o_ref[...] = jnp.maximum(y, 0.0).astype(o_ref.dtype)


def conv1x1_bn_relu(x_flat, w, scale, bias, *, out_dtype, tile_m=512):
    """relu(bn(x @ w)) with x_flat:(M,Cin), w:(Cin,Cout_padded); M-tiled for pipelining."""
    m, cin = x_flat.shape
    cout = w.shape[1]                          # already lane-padded (multiple of 128)
    tile_m = min(tile_m, m)
    if tile_m < m:
        tile_m = max(16, (tile_m // 16) * 16)  # sublane-aligned tiles (bf16-safe)
    m_pad = _round_up(m, tile_m)
    if m_pad != m:
        x_flat = jnp.pad(x_flat, ((0, m_pad - m), (0, 0)))

    # Explicit scoped-VMEM budget: double-buffered input/output blocks + resident weights.
    in_bytes = (tile_m * cin + cin * cout + 2 * cout) * x_flat.dtype.itemsize
    out_bytes = tile_m * cout * jnp.dtype(out_dtype).itemsize
    vmem_limit = int(min(max(2 * (in_bytes + out_bytes) + (4 << 20), 32 << 20), 64 << 20))

    out = pl.pallas_call(
        _conv1x1_bn_relu_kernel,
        out_shape=jax.ShapeDtypeStruct((m_pad, cout), out_dtype),
        grid=(m_pad // tile_m,),
        in_specs=[
            pl.BlockSpec((tile_m, cin), lambda i: (i, 0)),
            pl.BlockSpec((cin, cout), lambda i: (0, 0)),   # weights stay resident
            pl.BlockSpec((1, cout), lambda i: (0, 0)),
            pl.BlockSpec((1, cout), lambda i: (0, 0)),
        ],
        out_specs=pl.BlockSpec((tile_m, cout), lambda i: (i, 0)),
        compiler_params=pltpu.CompilerParams(
            dimension_semantics=("parallel",),
            vmem_limit_bytes=vmem_limit),
    )(x_flat, w, scale, bias)
    return out[:m] if m_pad != m else out


# ----------------------------------------------------------------------------
# Kernel B: fused 3x3 conv + BN + ReLU + 1x1 conv + BN + shortcut + add + ReLU.
# One grid step per batch element; out2/out3 never touch HBM.
# ----------------------------------------------------------------------------
def _fused_tail_kernel(has_sc, H, W, Wp, out1_ref, x_ref, w2_ref, w3_ref,
                       s2_ref, b2_ref, s3_ref, b3_ref, *rest):
    if has_sc:
        wsc_ref, ssc_ref, bsc_ref, o_ref, p1_ref, pcat_ref = rest
    else:
        o_ref, p1_ref, pcat_ref = rest

    L = H * Wp                  # flattened "garbage-column" conv2 output length
    cmid = out1_ref.shape[-1]   # lane-padded mid channels (multiple of 128)
    cexp = o_ref.shape[-1]      # lane-padded expanded channels (multiple of 128)
    cin = x_ref.shape[-1]
    cdt = out1_ref.dtype
    S = 8                       # aligned shift of the data region inside each flat row

    # ---- build the zero-halo conv2 input in the flat VMEM scratch ----------
    # Padded pixel (r, c), r in [-1, H], c in [-1, W], lives at flat index
    #   (r + 1) * Wp + S + c.
    # Only halo positions that valid outputs actually read are zeroed (every grid
    # step: under megacore sharding each TensorCore owns its own scratch).  All
    # stores below start at sublane-aligned offsets because Wp % 8 == 0 and S == 8.
    ztop = jnp.zeros((Wp + S, cmid), cdt)
    zgap = jnp.zeros((Wp - W, cmid), cdt)
    p1_ref[0:Wp + S, :] = ztop                                      # top halo row (+ left halo of row 0)
    p1_ref[(H + 1) * Wp:(H + 1) * Wp + Wp + S, :] = ztop            # bottom halo row
    for h in range(H):
        r0 = (h + 1) * Wp + S
        p1_ref[r0:r0 + W, :] = out1_ref[0, h]                       # data row (aligned start)
        p1_ref[r0 + W:r0 + Wp, :] = zgap                            # right halo + gap + next left halo

    # ---- conv2 as ONE deep matmul with K = 9*cmid ---------------------------
    # Stage the 9 shifted taps side by side (lane offsets are multiples of 128),
    # then contract against w2 reshaped to (9*cmid, cmid): the MXU accumulates
    # internally instead of 9 dot + f32-add round trips.
    for kh in range(3):
        for kw in range(3):
            t = kh * 3 + kw
            off = kh * Wp + kw + (S - 1)
            pcat_ref[:, t * cmid:(t + 1) * cmid] = p1_ref[off:off + L, :]
    y2 = jnp.dot(pcat_ref[...], w2_ref[...], preferred_element_type=jnp.float32)
    y2 = jnp.maximum(y2 * s2_ref[...] + b2_ref[...], 0.0)

    # Strip the halo/garbage columns on the cmid-wide tensor, BEFORE conv3.
    y2 = y2.reshape(H, Wp, cmid)[:, :W, :].reshape(H * W, cmid).astype(cdt)

    # ---- conv3 (1x1) + BN3 ---------------------------------------------------
    y3 = jnp.dot(y2, w3_ref[...], preferred_element_type=jnp.float32)
    y3 = y3 * s3_ref[...] + b3_ref[...]                              # (H*W, cexp)

    # ---- shortcut + add + ReLU ----------------------------------------------
    xf = x_ref[0].reshape(H * W, cin)
    if has_sc:
        sc = jnp.dot(xf, wsc_ref[...], preferred_element_type=jnp.float32)
        sc = sc * ssc_ref[...] + bsc_ref[...]
    else:
        sc = xf.astype(jnp.float32)          # identity: cin == cexp (lane-padded in wrapper)

    out = jnp.maximum(y3 + sc, 0.0)
    o_ref[0] = out.reshape(H, W, cexp).astype(o_ref.dtype)


def fused_conv2_conv3_shortcut(out1_nhwc, x_nhwc, w2, s2, b2, w3, s3, b3,
                               sc_params, *, out_dtype=None):
    n, h, w, cmid_p = out1_nhwc.shape
    cin = x_nhwc.shape[-1]
    cexp_p = w3.shape[-1]
    wp = _round_up(w + 2, 8)          # sublane-aligned flat row pitch
    nr = (h + 2) * wp + 16            # scratch rows (covers max tap offset)
    l = h * wp
    has_sc = sc_params is not None
    cdtype = out1_nhwc.dtype
    if out_dtype is None:
        out_dtype = cdtype            # out_dtype follows the compute dtype

    kernel = functools.partial(_fused_tail_kernel, has_sc, h, w, wp)

    in_specs = [
        pl.BlockSpec((1, h, w, cmid_p), lambda b: (b, 0, 0, 0)),
        pl.BlockSpec((1, h, w, cin), lambda b: (b, 0, 0, 0)),
        pl.BlockSpec((9 * cmid_p, cmid_p), lambda b: (0, 0)),   # resident weights
        pl.BlockSpec((cmid_p, cexp_p), lambda b: (0, 0)),
        pl.BlockSpec((1, cmid_p), lambda b: (0, 0)),
        pl.BlockSpec((1, cmid_p), lambda b: (0, 0)),
        pl.BlockSpec((1, cexp_p), lambda b: (0, 0)),
        pl.BlockSpec((1, cexp_p), lambda b: (0, 0)),
    ]
    args = [out1_nhwc, x_nhwc, w2, w3, s2, b2, s3, b3]
    if has_sc:
        wsc, ssc, bsc = sc_params
        in_specs += [
            pl.BlockSpec((cin, cexp_p), lambda b: (0, 0)),
            pl.BlockSpec((1, cexp_p), lambda b: (0, 0)),
            pl.BlockSpec((1, cexp_p), lambda b: (0, 0)),
        ]
        args += [wsc, ssc, bsc]

    # Explicit scoped-VMEM budget (double-buffered blocks + weights + scratches),
    # clamped so it is valid on v5e/v6e (128 MiB) and v7x (64 MiB) alike.
    itemsize = jnp.dtype(cdtype).itemsize
    blk_in = (h * w * (cmid_p + cin) + 9 * cmid_p * cmid_p + cmid_p * cexp_p
              + 2 * cmid_p + 2 * cexp_p)
    if has_sc:
        blk_in += cin * cexp_p + 2 * cexp_p
    blk_out = h * w * cexp_p
    scratch_elems = nr * cmid_p + l * 9 * cmid_p
    need = (2 * blk_in + 2 * blk_out + scratch_elems) * itemsize + (8 << 20)
    vmem_limit = int(min(max(need, 32 << 20), 64 << 20))

    return pl.pallas_call(
        kernel,
        out_shape=jax.ShapeDtypeStruct((n, h, w, cexp_p), out_dtype),
        grid=(n,),
        in_specs=in_specs,
        out_specs=pl.BlockSpec((1, h, w, cexp_p), lambda b: (b, 0, 0, 0)),
        scratch_shapes=[pltpu.VMEM((nr, cmid_p), cdtype),
                        pltpu.VMEM((l, 9 * cmid_p), cdtype)],
        compiler_params=pltpu.CompilerParams(
            dimension_semantics=("parallel",),
            vmem_limit_bytes=vmem_limit),
    )(*args)


# ----------------------------------------------------------------------------
# Module forward (Pallas) and pure-JAX reference
# ----------------------------------------------------------------------------
def _fold_bn(gamma, beta, mean, var, pad_to):
    scale = gamma / jnp.sqrt(var + _EPS)
    bias = beta - mean * scale
    pad = pad_to - scale.shape[0]
    if pad:
        scale = jnp.pad(scale, (0, pad))       # zero scale/bias on padded channels
        bias = jnp.pad(bias, (0, pad))
    return (scale[None, :].astype(jnp.float32),
            bias[None, :].astype(jnp.float32))


def ordered_bottleneck_pallas(x_nchw, features, params, stride=1,
                              compute_dtype=jnp.float32, tile_m=512):
    """Forward of OrderedBottleneck: returns (relu(bn3(conv3(...)) + shortcut), features)."""
    if stride != 1:
        # TODO(synk): stride>1 needs a decimated flat layout in the fused kernel.
        raise NotImplementedError("Pallas OrderedBottleneck supports stride=1 only")

    x = jnp.transpose(x_nchw, (0, 2, 3, 1)).astype(compute_dtype)   # NCHW -> NHWC
    n, h, w, cin = x.shape
    cmid = params["w1"].shape[0]
    cexp = params["w3"].shape[0]
    cmid_p = _round_up(cmid, _LANE)      # lane-padded channel widths
    cexp_p = _round_up(cexp, _LANE)

    s1, b1 = _fold_bn(*params["bn1"], cmid_p)
    s2, b2 = _fold_bn(*params["bn2"], cmid_p)
    s3, b3 = _fold_bn(*params["bn3"], cexp_p)

    def pad_cols(a, cols):
        return jnp.pad(a, ((0, 0), (0, cols - a.shape[1])))

    w1 = pad_cols(jnp.transpose(params["w1"][:, :, 0, 0], (1, 0)), cmid_p)
    w1 = w1.astype(compute_dtype)                                   # (Cin, Cmid_p)

    w2 = jnp.transpose(params["w2"], (2, 3, 1, 0)).reshape(9, cmid, cmid)
    w2 = jnp.pad(w2, ((0, 0), (0, cmid_p - cmid), (0, cmid_p - cmid)))
    w2 = w2.reshape(9 * cmid_p, cmid_p).astype(compute_dtype)       # (9*Cmid_p, Cmid_p)

    w3 = jnp.transpose(params["w3"][:, :, 0, 0], (1, 0))
    w3 = jnp.pad(w3, ((0, cmid_p - cmid), (0, cexp_p - cexp)))
    w3 = w3.astype(compute_dtype)                                   # (Cmid_p, Cexp_p)

    if "w_sc" in params:
        wsc = pad_cols(jnp.transpose(params["w_sc"][:, :, 0, 0], (1, 0)), cexp_p)
        wsc = wsc.astype(compute_dtype)
        ssc, bsc = _fold_bn(*params["bn_sc"], cexp_p)
        sc_params = (wsc, ssc, bsc)
        x_b = x
    else:
        assert stride == 1 and cin == cexp, (
            "identity shortcut requires stride==1 and in_planes == expansion*out_planes")
        sc_params = None
        # Lane-pad the identity-shortcut input so the fused kernel's residual add
        # and output stores stay on full 128-lane tiles (no in-kernel concat).
        x_b = (jnp.pad(x, ((0, 0), (0, 0), (0, 0), (0, cexp_p - cin)))
               if cexp_p != cin else x)

    # conv1 + bn1 + relu : M-tiled, pipelined, parallel 1x1 matmul (128-lane output).
    out1 = conv1x1_bn_relu(x.reshape(n * h * w, cin), w1, s1, b1,
                           out_dtype=compute_dtype, tile_m=tile_m)
    out1 = out1.reshape(n, h, w, cmid_p)

    # conv2 + bn2 + relu + conv3 + bn3 + shortcut + add + relu : one fused kernel.
    out = fused_conv2_conv3_shortcut(out1, x_b, w2, s2, b2, w3, s3, b3, sc_params,
                                     out_dtype=compute_dtype)
    out = out[..., :cexp]                                            # strip lane padding
    out = jnp.transpose(out, (0, 3, 1, 2))                           # NHWC -> NCHW
    return out, features


def ordered_bottleneck_ref(x, features, params, stride=1):
    def conv(v, w, s=1, pad=0):
        return jax.lax.conv_general_dilated(
            v, w, (s, s), [(pad, pad), (pad, pad)],
            dimension_numbers=("NCHW", "OIHW", "NCHW"))

    def bn(v, gbmv):
        g, b, m, var = gbmv
        scale = g / jnp.sqrt(var + _EPS)
        bias = b - m * scale
        return v * scale[None, :, None, None] + bias[None, :, None, None]

    out = jax.nn.relu(bn(conv(x, params["w1"]), params["bn1"]))
    out = jax.nn.relu(bn(conv(out, params["w2"], s=stride, pad=1), params["bn2"]))
    out = bn(conv(out, params["w3"]), params["bn3"])
    if "w_sc" in params:
        sc = bn(conv(x, params["w_sc"], s=stride), params["bn_sc"])
    else:
        sc = x
    return jax.nn.relu(out + sc), features


# ----------------------------------------------------------------------------
# Deterministic parameter construction (shapes from module __init__)
# ----------------------------------------------------------------------------
def make_params(key, cin, cmid, stride=1):
    cexp = 4 * cmid  # expansion = 4
    keys = jax.random.split(key, 8)

    def conv_w(k, shape):
        return 0.1 * jax.random.normal(k, shape, jnp.float32)

    def bn_p(k, c):
        k1, k2, k3, k4 = jax.random.split(k, 4)
        gamma = jax.random.uniform(k1, (c,), jnp.float32, 0.5, 1.5)
        beta = 0.1 * jax.random.normal(k2, (c,), jnp.float32)
        mean = 0.1 * jax.random.normal(k3, (c,), jnp.float32)
        var = jax.random.uniform(k4, (c,), jnp.float32, 0.5, 1.5)
        return (gamma, beta, mean, var)

    params = {
        "w1": conv_w(keys[0], (cmid, cin, 1, 1)),
        "bn1": bn_p(keys[1], cmid),
        "w2": conv_w(keys[2], (cmid, cmid, 3, 3)),
        "bn2": bn_p(keys[3], cmid),
        "w3": conv_w(keys[4], (cexp, cmid, 1, 1)),
        "bn3": bn_p(keys[5], cexp),
    }
    if stride != 1 or cin != cexp:
        params["w_sc"] = conv_w(keys[6], (cexp, cin, 1, 1))
        params["bn_sc"] = bn_p(keys[7], cexp)
    return params


if __name__ == "__main__":
    key = jax.random.PRNGKey(0)
    k_x, k_f, k_p, k_p2 = jax.random.split(key, 4)

    # Config 1: in_planes=16, out_planes=8 -> expansion*out=32 != 16, so the
    # conv-shortcut path is exercised.  Spatial 16x16 so the M-tiled 1x1 kernel
    # runs a multi-step pipelined grid (tile_m=128 -> 4 tiles).
    N, CIN, H, W, CMID = 2, 16, 16, 16, 8
    x = jax.random.normal(k_x, (N, CIN, H, W), jnp.float32)
    features = jax.random.normal(k_f, (N, 8), jnp.float32)
    params = make_params(k_p, CIN, CMID, stride=1)
    ref_out, ref_feats = ordered_bottleneck_ref(x, features, params)

    # f32 compute path (exact up to matmul rounding).
    out_f32, feats = ordered_bottleneck_pallas(
        x, features, params, compute_dtype=jnp.float32, tile_m=128)
    out_f32 = jax.block_until_ready(out_f32)
    np.testing.assert_allclose(np.asarray(out_f32), np.asarray(ref_out),
                               rtol=1e-4, atol=1e-4)
    np.testing.assert_allclose(np.asarray(feats), np.asarray(ref_feats))

    # bf16 compute path (MXU-friendly; f32 accumulation/epilogue), looser tolerance.
    out_bf16, _ = ordered_bottleneck_pallas(
        x, features, params, compute_dtype=jnp.bfloat16, tile_m=128)
    out_bf16 = jax.block_until_ready(out_bf16)
    np.testing.assert_allclose(np.asarray(jnp.asarray(out_bf16, jnp.float32)),
                               np.asarray(ref_out), rtol=5e-2, atol=5e-2)

    # Config 2: in_planes == expansion*out_planes -> identity shortcut path.
    CIN2 = 32
    x2 = jax.random.normal(k_x, (N, CIN2, H, W), jnp.float32)
    params2 = make_params(k_p2, CIN2, CMID, stride=1)
    assert "w_sc" not in params2
    ref_out2, _ = ordered_bottleneck_ref(x2, features, params2)
    out2, _ = ordered_bottleneck_pallas(x2, features, params2,
                                        compute_dtype=jnp.float32)
    out2 = jax.block_until_ready(out2)
    np.testing.assert_allclose(np.asarray(out2), np.asarray(ref_out2),
                               rtol=1e-4, atol=1e-4)

    print("KERNEL_OK")
</pallas_src>

<mosaic_0001>
module attributes {stable_mosaic.version = 11 : i64} {
  func.func @_conv1x1_bn_relu_kernel(%arg0: i32, %arg1: memref<128x16xf32, #tpu.memory_space<vmem>>, %arg2: memref<16x128xf32, #tpu.memory_space<vmem>>, %arg3: memref<1x128xf32, #tpu.memory_space<vmem>>, %arg4: memref<1x128xf32, #tpu.memory_space<vmem>>, %arg5: memref<128x128xf32, #tpu.memory_space<vmem>>) attributes {dimension_semantics = [#tpu.dimension_semantics<parallel>], iteration_bounds = array<i64: 4>, scalar_prefetch = 0 : i64, scratch_operands = 0 : i64, tpu.core_type = #tpu.core_type<tc>, window_params = [{transform_indices = @transform_0, window_bounds = array<i64: 128, 16>}, {pipeline_mode = #tpu.pipeline_mode<synchronous>, transform_indices = @transform_1, window_bounds = array<i64: 16, 128>}, {pipeline_mode = #tpu.pipeline_mode<synchronous>, transform_indices = @transform_2, window_bounds = array<i64: 1, 128>}, {pipeline_mode = #tpu.pipeline_mode<synchronous>, transform_indices = @transform_3, window_bounds = array<i64: 1, 128>}, {transform_indices = @transform_4, window_bounds = array<i64: 128, 128>}]} {
    %c0 = arith.constant 0 : index
    %c0_0 = arith.constant 0 : index
    %0 = vector.load %arg1[%c0, %c0_0] : memref<128x16xf32, #tpu.memory_space<vmem>>, vector<128x16xf32>
    %c0_1 = arith.constant 0 : index
    %c0_2 = arith.constant 0 : index
    %1 = vector.load %arg2[%c0_1, %c0_2] : memref<16x128xf32, #tpu.memory_space<vmem>>, vector<16x128xf32>
    %cst = arith.constant dense<0.000000e+00> : vector<128x128xf32>
    %2 = tpu.matmul %0, %1, %cst {dimension_numbers = #tpu.dot_dimension_numbers<[1], [0], [0], [1], [0, 0, 1, 1], [], []>} : vector<128x16xf32>, vector<16x128xf32>, vector<128x128xf32> -> vector<128x128xf32>
    %c0_3 = arith.constant 0 : index
    %c0_4 = arith.constant 0 : index
    %3 = vector.load %arg3[%c0_3, %c0_4] : memref<1x128xf32, #tpu.memory_space<vmem>>, vector<1x128xf32>
    %4 = vector.broadcast %3 : vector<1x128xf32> to vector<128x128xf32>
    %5 = arith.mulf %2, %4 : vector<128x128xf32>
    %c0_5 = arith.constant 0 : index
    %c0_6 = arith.constant 0 : index
    %6 = vector.load %arg4[%c0_5, %c0_6] : memref<1x128xf32, #tpu.memory_space<vmem>>, vector<1x128xf32>
    %7 = vector.broadcast %6 : vector<1x128xf32> to vector<128x128xf32>
    %8 = arith.addf %5, %7 : vector<128x128xf32>
    %cst_7 = arith.constant 0.000000e+00 : f32
    %9 = vector.broadcast %cst_7 : f32 to vector<128x128xf32>
    %10 = arith.maximumf %8, %9 : vector<128x128xf32>
    %c0_8 = arith.constant 0 : index
    %c0_9 = arith.constant 0 : index
    %11 = vector.load %arg5[%c0_8, %c0_9] : memref<128x128xf32, #tpu.memory_space<vmem>>, vector<128x128xf32>
    tpu.vector_store %arg5[%c0_8, %c0_9], %10 {strides = array<i32>} : memref<128x128xf32, #tpu.memory_space<vmem>>, vector<128x128xf32>,
    return
  }
  func.func @transform_0(%arg0: i32) -> (i32, i32) {
    %c0_i32 = arith.constant 0 : i32
    %c0_i32_0 = arith.constant 0 : i32
    return %arg0, %c0_i32 : i32, i32
  }
  func.func @transform_1(%arg0: i32) -> (i32, i32) {
    %c0_i32 = arith.constant 0 : i32
    %c0_i32_0 = arith.constant 0 : i32
    %c0_i32_1 = arith.constant 0 : i32
    return %c0_i32, %c0_i32_0 : i32, i32
  }
  func.func @transform_2(%arg0: i32) -> (i32, i32) {
    %c0_i32 = arith.constant 0 : i32
    %c0_i32_0 = arith.constant 0 : i32
    %c0_i32_1 = arith.constant 0 : i32
    return %c0_i32, %c0_i32_0 : i32, i32
  }
  func.func @transform_3(%arg0: i32) -> (i32, i32) {
    %c0_i32 = arith.constant 0 : i32
    %c0_i32_0 = arith.constant 0 : i32
    %c0_i32_1 = arith.constant 0 : i32
    return %c0_i32, %c0_i32_0 : i32, i32
  }
  func.func @transform_4(%arg0: i32) -> (i32, i32) {
    %c0_i32 = arith.constant 0 : i32
    %c0_i32_0 = arith.constant 0 : i32
    return %arg0, %c0_i32 : i32, i32
  }
}

</mosaic_0001>

<llo_original>
// kernel: tpu_custom_call.1
$region0: #{tpu_custom_call.1}
  #allocation0 [shape = 'u32[]', space=smem, size = 0x4, offset = 0x4, fixed_abs, tag = 'smem constant byte address 0x4 - core index']
  #allocation1 [shape = 'u32[144,128]{1,0:T(1,128)}', space=vmem, size = 0x12000, scoped, tag = 'internal scratch']
  %s0 = inlined_call_operand.vmem [shape: f32[512,16], index: 0, kind: input, shape index: {}]
  %s1 = inlined_call_operand.vmem [shape: f32[16,128], index: 1, kind: input, shape index: {}]
  %s2 = inlined_call_operand.vmem [shape: f32[1,128], index: 2, kind: input, shape index: {}]
  %s3 = inlined_call_operand.vmem [shape: f32[1,128], index: 3, kind: input, shape index: {}]
  %s4 = inlined_call_operand.hbm [shape: f32[512,128], index: 4, kind: output, shape index: {}]
  %s5 = sld [smem:[#allocation0]]
  $region49: #{tpu_custom_call.1} parent=0
    _
  %s7 = ssub.s32 1, %s5
  %s8 = scalar_select 0, %s7, %s5
  $region1: #{tpu_custom_call.1} parent=0
    #allocation2 [shape = 'u8[131072]{0}', space=vmem, size = 0x20000, scoped, tag = 'output window, operand 0']
    #allocation3 [shape = 's32[2]{0}', space=sflag, size = 0x8, scoped, tag = 'scoped memory for tpu_custom_call.1']
    %9 = vsyncpa [#allocation3], 0
    %s10 = scalar_lea.sflag [#allocation3], 1
    %11 = vsyncpa %s10, 0
    loop: start=0, step=1, limit=6
    $region2: #{tpu_custom_call.1} parent=1 // loop_pre_header
      _
    $region3: #{tpu_custom_call.1} parent=1 // loop_header
      %s13 = sphi 0, %s17
      %p14 = scmp.ge.s32.totalorder %s13, 6
      %s23 = sphi 0, %s25
      %s26 = sphi 0, %s23
      %s27 = sphi 0, %s26
      %s43 = sphi 0, %s27
      %s47 = sphi 0, %s47
      %s49 = sphi 0, %s47
      %s50 = sphi 0, %s49
      %s64 = sphi 0, %s50
      %s68 = sphi 0, %s68
      %s70 = sphi 0, %s68
      %s71 = sphi 0, %s70
      %s85 = sphi 0, %s71
      %s89 = sphi 0, %s89
      %s91 = sphi 0, %s89
      %s92 = sphi 0, %s91
      %s106 = sphi 0, %s92
      %s112 = sphi 0, %s114
      %s115 = sphi 0, %s112
      %s116 = sphi 0, %s115
      %s132 = sphi 0, %s116
    $region4: #{tpu_custom_call.1} parent=1 // loop_header_branch
      %16 = sbr.rel (%p14) target = $region8
    $region5: #{tpu_custom_call.1} parent=1 // loop_body
      %s18 = ssub.s32 %s13, 1
      %s19 = ssub.s32 %s13, 2
      %s20 = sadd.s32 %s13, 1
      %s21 = ssub.s32 %s13, %s20
      %p22 = scmp.eq.s32.totalorder %s21, 0
      %s24 = sadd.s32 %s23, 1
      %s25 = scalar_select %p22, %s23, %s24
      %p28 = pneg %p22
      %p29 = scmp.eq.s32.totalorder %s13, 3
      %p30 = por %p28, %p29
      %p31 = scmp.ne.s32.totalorder %s23, %s26
      %p32 = scmp.eq.s32.totalorder %s13, 0
      %p33 = por %p31, %p32
      %p34 = scmp.ne.s32.totalorder %s23, %s26
      %p35 = scmp.eq.s32.totalorder %s18, 3
      %p36 = por %p34, %p35
      %p37 = scmp.ne.s32.totalorder %s26, %s27
      %p38 = scmp.eq.s32.totalorder %s18, 0
      %p39 = por %p37, %p38
      %p40 = scmp.ne.s32.totalorder %s26, %s27
      %p41 = scmp.eq.s32.totalorder %s19, 3
      %p42 = por %p40, %p41
      %p44 = scmp.ne.s32.totalorder %s27, %s43
      %p45 = scmp.eq.s32.totalorder %s19, 0
      %p46 = por %p44, %p45
      %s48 = sadd.s32 %s47, 1
      %p51 = scmp.eq.s32.totalorder %s13, 3
      %p52 = scmp.ne.s32.totalorder %s47, %s49
      %p53 = scmp.eq.s32.totalorder %s13, 0
      %p54 = por %p52, %p53
      %p55 = scmp.ne.s32.totalorder %s47, %s49
      %p56 = scmp.eq.s32.totalorder %s18, 3
      %p57 = por %p55, %p56
      %p58 = scmp.ne.s32.totalorder %s49, %s50
      %p59 = scmp.eq.s32.totalorder %s18, 0
      %p60 = por %p58, %p59
      %p61 = scmp.ne.s32.totalorder %s49, %s50
      %p62 = scmp.eq.s32.totalorder %s19, 3
      %p63 = por %p61, %p62
      %p65 = scmp.ne.s32.totalorder %s50, %s64
      %p66 = scmp.eq.s32.totalorder %s19, 0
      %p67 = por %p65, %p66
      %s69 = sadd.s32 %s68, 1
      %p72 = scmp.eq.s32.totalorder %s13, 3
      %p73 = scmp.ne.s32.totalorder %s68, %s70
      %p74 = scmp.eq.s32.totalorder %s13, 0
      %p75 = por %p73, %p74
      %p76 = scmp.ne.s32.totalorder %s68, %s70
      %p77 = scmp.eq.s32.totalorder %s18, 3
      %p78 = por %p76, %p77
      %p79 = scmp.ne.s32.totalorder %s70, %s71
      %p80 = scmp.eq.s32.totalorder %s18, 0
      %p81 = por %p79, %p80
      %p82 = scmp.ne.s32.totalorder %s70, %s71
      %p83 = scmp.eq.s32.totalorder %s19, 3
      %p84 = por %p82, %p83
      %p86 = scmp.ne.s32.totalorder %s71, %s85
      %p87 = scmp.eq.s32.totalorder %s19, 0
      %p88 = por %p86, %p87
      %s90 = sadd.s32 %s89, 1
      %p93 = scmp.eq.s32.totalorder %s13, 3
      %p94 = scmp.ne.s32.totalorder %s89, %s91
      %p95 = scmp.eq.s32.totalorder %s13, 0
      %p96 = por %p94, %p95
      %p97 = scmp.ne.s32.totalorder %s89, %s91
      %p98 = scmp.eq.s32.totalorder %s18, 3
      %p99 = por %p97, %p98
      %p100 = scmp.ne.s32.totalorder %s91, %s92
      %p101 = scmp.eq.s32.totalorder %s18, 0
      %p102 = por %p100, %p101
      %p103 = scmp.ne.s32.totalorder %s91, %s92
      %p104 = scmp.eq.s32.totalorder %s19, 3
      %p105 = por %p103, %p104
      %p107 = scmp.ne.s32.totalorder %s92, %s106
      %p108 = scmp.eq.s32.totalorder %s19, 0
      %p109 = por %p107, %p108
      %s110 = ssub.s32 %s13, %s20
      %p111 = scmp.eq.s32.totalorder %s110, 0
      %s113 = sadd.s32 %s112, 1
      %s114 = scalar_select %p111, %s112, %s113
      %p117 = pneg %p111
      %p118 = scmp.eq.s32.totalorder %s13, 3
      %p119 = por %p117, %p118
      %p120 = scmp.ne.s32.totalorder %s112, %s115
      %p121 = scmp.eq.s32.totalorder %s13, 0
      %p122 = por %p120, %p121
      %p123 = scmp.ne.s32.totalorder %s112, %s115
      %p124 = scmp.eq.s32.totalorder %s18, 3
      %p125 = por %p123, %p124
      %p126 = scmp.ne.s32.totalorder %s115, %s116
      %p127 = scmp.eq.s32.totalorder %s18, 0
      %p128 = por %p126, %p127
      %p129 = scmp.ne.s32.totalorder %s115, %s116
      %p130 = scmp.eq.s32.totalorder %s19, 3
      %p131 = por %p129, %p130
      %p133 = scmp.ne.s32.totalorder %s116, %s132
      %p134 = scmp.eq.s32.totalorder %s19, 0
      %p135 = por %p133, %p134
      %p136 = scmp.le.s32.totalorder 1, %s13
      %p137 = scmp.lt.s32.totalorder %s13, 5
      %p138 = pnand %p136, %p137
      %p139 = pneg %p138
      // Predicated region
      $region9: #{tpu_custom_call.1} parent=5 // pred_check
        _
      $region10: #{tpu_custom_call.1} parent=5 // pred_check_branch
        %141 = sbr.rel (%p138) target = $region12
      $region11: #{tpu_custom_call.1} parent=5 // pred_region
        %s142 = ssub.s32 %s13, 1
        // Predicated region
        $region13: #{tpu_custom_call.1} parent=11 // pred_check
          %p143 = pneg %p60
        $region14: #{tpu_custom_call.1} parent=11 // pred_check_branch
          %145 = sbr.rel (%p143) target = $region16
        $region15: #{tpu_custom_call.1} parent=11 // pred_region
          _
        $region16: #{tpu_custom_call.1} parent=11 // pred_fallthru
          _
        // Predicated region
        $region17: #{tpu_custom_call.1} parent=11 // pred_check
          %p146 = pneg %p81
        $region18: #{tpu_custom_call.1} parent=11 // pred_check_branch
          %148 = sbr.rel (%p146) target = $region20
        $region19: #{tpu_custom_call.1} parent=11 // pred_region
          _
        $region20: #{tpu_custom_call.1} parent=11 // pred_fallthru
          _
        // Predicated region
        $region21: #{tpu_custom_call.1} parent=11 // pred_check
          %p149 = pneg %p102
        $region22: #{tpu_custom_call.1} parent=11 // pred_check_branch
          %151 = sbr.rel (%p149) target = $region24
        $region23: #{tpu_custom_call.1} parent=11 // pred_region
          _
        $region24: #{tpu_custom_call.1} parent=11 // pred_fallthru
          _
      $region12: #{tpu_custom_call.1} parent=5 // pred_fallthru
        _
      %p152 = scmp.lt.s32.totalorder %s13, 4
      // Predicated region
      $region25: #{tpu_custom_call.1} parent=5 // pred_check
        %p153 = pneg %p152
      $region26: #{tpu_custom_call.1} parent=5 // pred_check_branch
        %155 = sbr.rel (%p153) target = $region28
      $region27: #{tpu_custom_call.1} parent=5 // pred_region
        // Predicated region
        $region29: #{tpu_custom_call.1} parent=27 // pred_check
          %p156 = pneg %p33
        $region30: #{tpu_custom_call.1} parent=27 // pred_check_branch
          %158 = sbr.rel (%p156) target = $region32
        $region31: #{tpu_custom_call.1} parent=27 // pred_region
          %s159 = smul.u32 16, %s13
          %p160 = scmp.lt.s32.totalorder %s159, 63
          %s161 = scalar_select %p160, %s159, 63
          %s162 = smul.addr %s161, 8
          %s163 = scalar_lea.vmem %s0, %s162
          %s164 = smul.u32 16, %s13
        $region32: #{tpu_custom_call.1} parent=27 // pred_fallthru
          _
      $region28: #{tpu_custom_call.1} parent=5 // pred_fallthru
        _
      %p165 = scmp.le.s32.totalorder 1, %s13
      %p166 = scmp.lt.s32.totalorder %s13, 5
      %p167 = pnand %p165, %p166
      %p168 = pneg %p167
      // Predicated region
      $region33: #{tpu_custom_call.1} parent=5 // pred_check
        _
      $region34: #{tpu_custom_call.1} parent=5 // pred_check_branch
        %170 = sbr.rel (%p167) target = $region36
      $region35: #{tpu_custom_call.1} parent=5 // pred_region
        %s171 = ssub.s32 %s13, 1
        %s172 = smul.u32 16, %s18
        %p173 = scmp.lt.s32.totalorder %s172, 63
        %s174 = scalar_select %p173, %s172, 63
        %s175 = smul.addr %s174, 8
        %s176 = scalar_lea.vmem %s0, %s175
        %p177 = pneg %p39
        %p178 = pneg %p36
        %p179 = pneg %p60
        %p180 = pneg %p57
        %p181 = pneg %p81
        %p182 = pneg %p78
        %p183 = pneg %p102
        %p184 = pneg %p99
        %p185 = pneg %p128
        %p186 = pneg %p125
        %s187 = sand.u32 %s115, 1
        %s188 = scalar_lea.sflag [#allocation3], %s187
        %s189 = sand.u32 %s115, 1
        %s190 = smul.addr %s189, 128
        %s191 = scalar_lea.vmem [#allocation2], %s190
        %s192 = smul.u32 16, %s18
        %p193 = scmp.lt.s32.totalorder %s192, 63
        %s194 = scalar_select %p193, %s192, 63
        %s195 = smul.addr %s194, 8
        %s196 = scalar_lea.vmem %s0, %s195
        %s197 = smul.u32 16, %s18
        %s198 = smul.u32 16, %s18
        %v199 = vld [vmem:[%s196] sm:$0xff]
        %v200 = vld [vmem:[%s196 + $0x8] sm:$0xff]
        %v201 = vld [vmem:[%s196 + $0x10] sm:$0xff]
        %v202 = vld [vmem:[%s196 + $0x18] sm:$0xff]
        %v203 = vld [vmem:[%s196 + $0x20] sm:$0xff]
        %v204 = vld [vmem:[%s196 + $0x28] sm:$0xff]
        %v205 = vld [vmem:[%s196 + $0x30] sm:$0xff]
        %v206 = vld [vmem:[%s196 + $0x38] sm:$0xff]
        %v207 = vld [vmem:[%s196 + $0x40] sm:$0xff]
        %v208 = vld [vmem:[%s196 + $0x48] sm:$0xff]
        %v209 = vld [vmem:[%s196 + $0x50] sm:$0xff]
        %v210 = vld [vmem:[%s196 + $0x58] sm:$0xff]
        %v211 = vld [vmem:[%s196 + $0x60] sm:$0xff]
        %v212 = vld [vmem:[%s196 + $0x68] sm:$0xff]
        %v213 = vld [vmem:[%s196 + $0x70] sm:$0xff]
        %v214 = vld [vmem:[%s196 + $0x78] sm:$0xff]
        %v215 = vld [vmem:[%s1] sm:$0xff]
        %v216 = vld [vmem:[%s1 + $0x8] sm:$0xff]
        %vm217 = vcmask 130048
        %v219 = vsel %vm217, %v199, 0
        %v222 = vsel %vm217, %v200, 0
        %v225 = vsel %vm217, %v201, 0
        %v228 = vsel %vm217, %v202, 0
        %v231 = vsel %vm217, %v203, 0
        %v234 = vsel %vm217, %v204, 0
        %v237 = vsel %vm217, %v205, 0
        %v240 = vsel %vm217, %v206, 0
        %v243 = vsel %vm217, %v207, 0
        %v246 = vsel %vm217, %v208, 0
        %v249 = vsel %vm217, %v209, 0
        %v252 = vsel %vm217, %v210, 0
        %v255 = vsel %vm217, %v211, 0
        %v258 = vsel %vm217, %v212, 0
        %v261 = vsel %vm217, %v213, 0
        %v264 = vsel %vm217, %v214, 0
        %266 = vmatprep.subr.mxu0 0.0
        %267 = vmatpush1.msra.mxu0 %v215
        %268 = vmatprep.subr.mxu0 0.0
        %269 = vmatpush1.msra.mxu0 %v216
        %270 = vmatprep.subr.mxu0 0.0
        %271 = vmatpush1.msra.mxu0 0.0
        %272 = vmatprep.subr.mxu0 0.0
        %273 = vmatpush1.msra.mxu0 0.0
        %274 = vmatprep.subr.mxu0 0.0
        %275 = vmatpush1.msra.mxu0 0.0
        %276 = vmatprep.subr.mxu0 0.0
        %277 = vmatpush1.msra.mxu0 0.0
        %278 = vmatprep.subr.mxu0 0.0
        %279 = vmatpush1.msra.mxu0 0.0
        %280 = vmatprep.subr.mxu0 0.0
        %281 = vmatpush1.msra.mxu0 0.0
        %282 = vmatprep.subr.mxu0 0.0
        %283 = vmatpush1.msra.mxu0 0.0
        %284 = vmatprep.subr.mxu0 0.0
        %285 = vmatpush1.msra.mxu0 0.0
        %286 = vmatprep.subr.mxu0 0.0
        %287 = vmatpush1.msra.mxu0 0.0
        %288 = vmatprep.subr.mxu0 0.0
        %289 = vmatpush1.msra.mxu0 0.0
        %290 = vmatprep.subr.mxu0 0.0
        %291 = vmatpush1.msra.mxu0 0.0
        %292 = vmatprep.subr.mxu0 0.0
        %293 = vmatpush1.msra.mxu0 0.0
        %294 = vmatprep.subr.mxu0 0.0
        %295 = vmatpush1.msra.mxu0 0.0
        %296 = vmatprep.subr.mxu0 0.0
        %297 = vmatpush1.msra.mxu0 0.0
        %298 = vmatprep.subr.mxu0 0.0
        %299 = vmatpush1.msra.mxu0 0.0
        %300 = vmatprep.subr.mxu0 0.0
        %301 = vmatpush1.msra.mxu0 0.0
        %302 = vmatprep.subr.mxu0 0.0
        %303 = vmatpush1.msra.mxu0 0.0
        %304 = vmatprep.subr.mxu0 0.0
        %305 = vmatpush1.msra.mxu0 0.0
        %306 = vmatprep.subr.mxu0 0.0
        %307 = vmatpush1.msra.mxu0 0.0
        %308 = vmatprep.subr.mxu0 0.0
        %309 = vmatpush1.msra.mxu0 0.0
        %310 = vmatprep.subr.mxu0 0.0
        %311 = vmatpush1.msra.mxu0 0.0
        %312 = vmatprep.subr.mxu0 0.0
        %313 = vmatpush1.msra.mxu0 0.0
        %314 = vmatprep.subr.mxu0 0.0
        %315 = vmatpush1.msra.mxu0 0.0
        %316 = vmatprep.subr.mxu0 0.0
        %317 = vmatpush1.msra.mxu0 0.0
        %318 = vmatprep.subr.mxu0 0.0
        %319 = vmatpush1.msra.mxu0 0.0
        %320 = vmatprep.subr.mxu0 0.0
        %321 = vmatpush1.msra.mxu0 0.0
        %322 = vmatprep.subr.mxu0 0.0
        %323 = vmatpush1.msra.mxu0 0.0
        %324 = vmatprep.subr.mxu0 0.0
        %325 = vmatpush1.msra.mxu0 0.0
        %326 = vmatprep.subr.mxu0 0.0
        %327 = vmatpush1.msra.mxu0 0.0
        %328 = vmatprep.subr.mxu0 0.0
        %329 = vmatpush1.msra.mxu0 0.0
        %330 = vmatprep.mubr.f32.mxu0 0.0
        %331 = vmatmul.mubr.f32.gmra.mrb[0].mxu0 %v219
        %v332 = vpop.f32.mrb[0].mxu0
        %v333 = vadd.f32 0.0, %v332
        %v334 = vpop.f32.mrb[0].mxu0
        %335 = vmatprep.mubr.f32.mxu0 0.0
        %336 = vmatmul.mubr.f32.gmra.mrb[0].mxu0 %v222
        %v337 = vpop.f32.mrb[0].mxu0
        %v338 = vadd.f32 0.0, %v337
        %v339 = vpop.f32.mrb[0].mxu0
        %340 = vmatprep.mubr.f32.mxu0 0.0
        %341 = vmatmul.mubr.f32.gmra.mrb[0].mxu0 %v225
        %v342 = vpop.f32.mrb[0].mxu0
        %v343 = vadd.f32 0.0, %v342
        %v344 = vpop.f32.mrb[0].mxu0
        %345 = vmatprep.mubr.f32.mxu0 0.0
        %346 = vmatmul.mubr.f32.gmra.mrb[0].mxu0 %v228
        %v347 = vpop.f32.mrb[0].mxu0
        %v348 = vadd.f32 0.0, %v347
        %v349 = vpop.f32.mrb[0].mxu0
        %350 = vmatprep.mubr.f32.mxu0 0.0
        %351 = vmatmul.mubr.f32.gmra.mrb[0].mxu0 %v231
        %v352 = vpop.f32.mrb[0].mxu0
        %v353 = vadd.f32 0.0, %v352
        %v354 = vpop.f32.mrb[0].mxu0
        %355 = vmatprep.mubr.f32.mxu0 0.0
        %356 = vmatmul.mubr.f32.gmra.mrb[0].mxu0 %v234
        %v357 = vpop.f32.mrb[0].mxu0
        %v358 = vadd.f32 0.0, %v357
        %v359 = vpop.f32.mrb[0].mxu0
        %360 = vmatprep.mubr.f32.mxu0 0.0
        %361 = vmatmul.mubr.f32.gmra.mrb[0].mxu0 %v237
        %v362 = vpop.f32.mrb[0].mxu0
        %v363 = vadd.f32 0.0, %v362
        %v364 = vpop.f32.mrb[0].mxu0
        %365 = vmatprep.mubr.f32.mxu0 0.0
        %366 = vmatmul.mubr.f32.gmra.mrb[0].mxu0 %v240
        %v367 = vpop.f32.mrb[0].mxu0
        %v368 = vadd.f32 0.0, %v367
        %v369 = vpop.f32.mrb[0].mxu0
        %370 = vmatprep.mubr.f32.mxu0 0.0
        %371 = vmatmul.mubr.f32.gmra.mrb[0].mxu0 %v243
        %v372 = vpop.f32.mrb[0].mxu0
        %v373 = vadd.f32 0.0, %v372
        %v374 = vpop.f32.mrb[0].mxu0
        %375 = vmatprep.mubr.f32.mxu0 0.0
        %376 = vmatmul.mubr.f32.gmra.mrb[0].mxu0 %v246
        %v377 = vpop.f32.mrb[0].mxu0
        %v378 = vadd.f32 0.0, %v377
        %v379 = vpop.f32.mrb[0].mxu0
        %380 = vmatprep.mubr.f32.mxu0 0.0
        %381 = vmatmul.mubr.f32.gmra.mrb[0].mxu0 %v249
        %v382 = vpop.f32.mrb[0].mxu0
        %v383 = vadd.f32 0.0, %v382
        %v384 = vpop.f32.mrb[0].mxu0
        %385 = vmatprep.mubr.f32.mxu0 0.0
        %386 = vmatmul.mubr.f32.gmra.mrb[0].mxu0 %v252
        %v387 = vpop.f32.mrb[0].mxu0
        %v388 = vadd.f32 0.0, %v387
        %v389 = vpop.f32.mrb[0].mxu0
        %390 = vmatprep.mubr.f32.mxu0 0.0
        %391 = vmatmul.mubr.f32.gmra.mrb[0].mxu0 %v255
        %v392 = vpop.f32.mrb[0].mxu0
        %v393 = vadd.f32 0.0, %v392
        %v394 = vpop.f32.mrb[0].mxu0
        %395 = vmatprep.mubr.f32.mxu0 0.0
        %396 = vmatmul.mubr.f32.gmra.mrb[0].mxu0 %v258
        %v397 = vpop.f32.mrb[0].mxu0
        %v398 = vadd.f32 0.0, %v397
        %v399 = vpop.f32.mrb[0].mxu0
        %400 = vmatprep.mubr.f32.mxu0 0.0
        %401 = vmatmul.mubr.f32.gmra.mrb[0].mxu0 %v261
        %v402 = vpop.f32.mrb[0].mxu0
        %v403 = vadd.f32 0.0, %v402
        %v404 = vpop.f32.mrb[0].mxu0
        %405 = vmatprep.mubr.f32.mxu0 0.0
        %406 = vmatmul.mubr.f32.gmra.mrb[0].mxu0 %v264
        %v407 = vpop.f32.mrb[0].mxu0
        %v408 = vadd.f32 0.0, %v407
        %v409 = vpop.f32.mrb[0].mxu0
        %410 = vdwg.mxu0
        %v411 = vld [vmem:[%s2] sm:$0x1]
        %v413 = vlaneseq
        %v414 = vshrl.u32 %v413, 7
        %v415 = vsub.s32 0, %v414
        %v416 = vrot.slane %v411, %v415
        %v418 = vmul.f32 %v333, %v416
        %v419 = vmul.f32 %v338, %v416
        %v420 = vmul.f32 %v343, %v416
        %v421 = vmul.f32 %v348, %v416
        %v422 = vmul.f32 %v353, %v416
        %v423 = vmul.f32 %v358, %v416
        %v424 = vmul.f32 %v363, %v416
        %v425 = vmul.f32 %v368, %v416
        %v426 = vmul.f32 %v373, %v416
        %v427 = vmul.f32 %v378, %v416
        %v428 = vmul.f32 %v383, %v416
        %v429 = vmul.f32 %v388, %v416
        %v430 = vmul.f32 %v393, %v416
        %v431 = vmul.f32 %v398, %v416
        %v432 = vmul.f32 %v403, %v416
        %v433 = vmul.f32 %v408, %v416
        %v434 = vld [vmem:[%s3] sm:$0x1]
        %v436 = vlaneseq
        %v437 = vshrl.u32 %v436, 7
        %v438 = vsub.s32 0, %v437
        %v439 = vrot.slane %v434, %v438
        %v441 = vadd.f32 %v418, %v439
        %v442 = vadd.f32 %v419, %v439
        %v443 = vadd.f32 %v420, %v439
        %v444 = vadd.f32 %v421, %v439
        %v445 = vadd.f32 %v422, %v439
        %v446 = vadd.f32 %v423, %v439
        %v447 = vadd.f32 %v424, %v439
        %v448 = vadd.f32 %v425, %v439
        %v449 = vadd.f32 %v426, %v439
        %v450 = vadd.f32 %v427, %v439
        %v451 = vadd.f32 %v428, %v439
        %v452 = vadd.f32 %v429, %v439
        %v453 = vadd.f32 %v430, %v439
        %v454 = vadd.f32 %v431, %v439
        %v455 = vadd.f32 %v432, %v439
        %v456 = vadd.f32 %v433, %v439
        %v457 = vmax.f32 %v441, 0.0
        %v458 = vmax.f32 %v442, 0.0
        %v459 = vmax.f32 %v443, 0.0
        %v460 = vmax.f32 %v444, 0.0
        %v461 = vmax.f32 %v445, 0.0
        %v462 = vmax.f32 %v446, 0.0
        %v463 = vmax.f32 %v447, 0.0
        %v464 = vmax.f32 %v448, 0.0
        %v465 = vmax.f32 %v449, 0.0
        %v466 = vmax.f32 %v450, 0.0
        %v467 = vmax.f32 %v451, 0.0
        %v468 = vmax.f32 %v452, 0.0
        %v469 = vmax.f32 %v453, 0.0
        %v470 = vmax.f32 %v454, 0.0
        %v471 = vmax.f32 %v455, 0.0
        %v472 = vmax.f32 %v456, 0.0
        %473 = vst [vmem:[%s191] sm:$0xff] %v457
        %474 = vst [vmem:[%s191 + $0x8] sm:$0xff] %v458
        %475 = vst [vmem:[%s191 + $0x10] sm:$0xff] %v459
        %476 = vst [vmem:[%s191 + $0x18] sm:$0xff] %v460
        %477 = vst [vmem:[%s191 + $0x20] sm:$0xff] %v461
        %478 = vst [vmem:[%s191 + $0x28] sm:$0xff] %v462
        %479 = vst [vmem:[%s191 + $0x30] sm:$0xff] %v463
        %480 = vst [vmem:[%s191 + $0x38] sm:$0xff] %v464
        %481 = vst [vmem:[%s191 + $0x40] sm:$0xff] %v465
        %482 = vst [vmem:[%s191 + $0x48] sm:$0xff] %v466
        %483 = vst [vmem:[%s191 + $0x50] sm:$0xff] %v467
        %484 = vst [vmem:[%s191 + $0x58] sm:$0xff] %v468
        %485 = vst [vmem:[%s191 + $0x60] sm:$0xff] %v469
        %486 = vst [vmem:[%s191 + $0x68] sm:$0xff] %v470
        %487 = vst [vmem:[%s191 + $0x70] sm:$0xff] %v471
        %488 = vst [vmem:[%s191 + $0x78] sm:$0xff] %v472
        %s489 = sand.u32 %s115, 1
        %s490 = scalar_lea.sflag [#allocation3], %s489
        %s491 = sand.u32 %s115, 1
        %s492 = smul.addr %s491, 128
        %s493 = scalar_lea.vmem [#allocation2], %s492
        // Predicated region
        $region37: #{tpu_custom_call.1} parent=35 // pred_check
          %p494 = pneg %p125
        $region38: #{tpu_custom_call.1} parent=35 // pred_check_branch
          %496 = sbr.rel (%p494) target = $region40
        $region39: #{tpu_custom_call.1} parent=35 // pred_region
          %s497 = smul.u32 16, %s18
          %s499 = ssub.s32 2048, 2048
          %500 = vsyncadd %s490, %s499
          %s501 = smul.addr %s497, 128
          %s502 = scalar_lea.hbm %s4, %s501
          %s503 = sshll.u32 %s493, 4
          %s504 = int_to_ptr.vmem [resolvable:$true] %s503
          %509 = dma.vmem_to_hbm [thread:$0]  %s504, 2048, %s502, %s490, 128, 128, 8
        $region40: #{tpu_custom_call.1} parent=35 // pred_fallthru
          _
      $region36: #{tpu_custom_call.1} parent=5 // pred_fallthru
        _
      %p510 = scmp.le.s32.totalorder 2, %s13
      // Predicated region
      $region41: #{tpu_custom_call.1} parent=5 // pred_check
        %p511 = pneg %p510
      $region42: #{tpu_custom_call.1} parent=5 // pred_check_branch
        %513 = sbr.rel (%p511) target = $region44
      $region43: #{tpu_custom_call.1} parent=5 // pred_region
        %s514 = ssub.s32 %s13, 2
        // Predicated region
        $region45: #{tpu_custom_call.1} parent=43 // pred_check
          %p515 = pneg %p131
        $region46: #{tpu_custom_call.1} parent=43 // pred_check_branch
          %517 = sbr.rel (%p515) target = $region48
        $region47: #{tpu_custom_call.1} parent=43 // pred_region
          %s518 = sand.u32 %s116, 1
          %s519 = scalar_lea.sflag [#allocation3], %s518
          %s520 = sand.u32 %s116, 1
          %s521 = smul.addr %s520, 128
          %s522 = scalar_lea.vmem [#allocation2], %s521
          %523 = dma.done %s519, 2048
        $region48: #{tpu_custom_call.1} parent=43 // pred_fallthru
          _
      $region44: #{tpu_custom_call.1} parent=5 // pred_fallthru
        _
    $region6: #{tpu_custom_call.1} parent=1 // loop_footer
      %s17 = sadd.s32 1, %s13
    $region7: #{tpu_custom_call.1} parent=1 // loop_footer_branch
      %12 = sbr.rel target = $region3
    $region8: #{tpu_custom_call.1} parent=1 // loop_exit
      _
    %524 = vsyncpa [#allocation3], 1
    %s525 = scalar_lea.sflag [#allocation3], 1
    %526 = vsyncpa %s525, 1

</llo_original>
